<compile_context>
chip_gen: v6e
topology: v6e:2x2x1
jax: 0.10.0
libtpu: 0.0.40
codegen_flags: <defaults>
</compile_context>

<pallas_src>
import jax
import jax.numpy as jnp
from jax import lax
from jax.experimental import pallas as pl
from jax.experimental.pallas import tpu as pltpu


_ONEHOT_MAX_NTOKEN = 4096   # above this, the one-hot gather is the wrong regime


def _round_up(x, m):
    return ((x + m - 1) // m) * m


# ---------------------------------------------------------------------------
# Path 1: small vocabulary — VMEM-resident table, one-hot MXU gather.
# ---------------------------------------------------------------------------
def _embed_onehot_kernel(ids_ref, emb_ref, out_ref):
    """Grid step i: out rows = table[ids[i*tile_m : (i+1)*tile_m]].

    ids_ref : (tile_m, 1) int32 flat ids in (b, s) order (permute folded)
    emb_ref : (ntoken, ninp) embedding table, VMEM-resident, single buffer
    out_ref : (tile_m, ninp) output tile
    """
    tile_m = ids_ref.shape[0]
    ntok = emb_ref.shape[0]
    ids = ids_ref[...]                                              # (tile_m, 1)
    onehot = (lax.broadcasted_iota(jnp.int32, (tile_m, ntok), 1)
              == ids).astype(emb_ref.dtype)                         # (tile_m, ntok)
    out_ref[...] = jnp.dot(
        onehot, emb_ref[...],
        preferred_element_type=jnp.float32).astype(out_ref.dtype)


# ---------------------------------------------------------------------------
# Path 2: large vocabulary — HBM-resident table, scalar-prefetched ids drive a
# per-row DMA gather directly into the output tile (bit-exact).
# ---------------------------------------------------------------------------
def _embed_dma_kernel(ids_smem, table_hbm, out_ref, sem):
    """ids_smem : (M_p,) int32 in SMEM (scalar prefetch)
    table_hbm : (ntoken, ninp) table ref left in HBM (memory_space=pl.ANY)
    out_ref   : (tile_m, ninp) output tile for grid step i
    sem       : scalar DMA semaphore
    """
    i = pl.program_id(0)
    tile_m = out_ref.shape[0]
    base = i * tile_m

    def issue(r, carry):
        tok = ids_smem[base + r]
        pltpu.make_async_copy(table_hbm.at[pl.ds(tok, 1), :],
                              out_ref.at[pl.ds(r, 1), :], sem).start()
        return carry

    lax.fori_loop(0, tile_m, issue, 0)

    def drain(r, carry):
        # All row copies have identical shape/dtype, so waiting with a dummy
        # same-shaped descriptor (documented idiom) matches one start each.
        pltpu.make_async_copy(table_hbm.at[pl.ds(0, 1), :],
                              out_ref.at[pl.ds(0, 1), :], sem).wait()
        return carry

    lax.fori_loop(0, tile_m, drain, 0)


# ---------------------------------------------------------------------------
# Wrapper
# ---------------------------------------------------------------------------
def mlp_forward(inp, emb_table, *, force_path=None):
    """inp: (S, B) integer token ids; emb_table: (ntoken, ninp) float table.

    Returns (outp, None) with
      outp == embedding(inp).permute(1, 0, 2).reshape(B, S * ninp)
    matching MLP.forward (hidden is always None, as in init_hidden).
    """
    S, B = inp.shape
    ntoken, ninp = emb_table.shape
    dtype = emb_table.dtype
    itemsize = jnp.dtype(dtype).itemsize

    # Fold permute(1, 0, 2): flat row m = b*S + s holds inp[s, b].  The (S, B)
    # int32 transpose in the wrapper is negligible (it is NOT the table).
    ids_flat = jnp.transpose(inp.astype(jnp.int32)).reshape(-1)     # (B*S,)

    M = B * S
    if M <= 256:
        tile_m = _round_up(M, 8)
        M_p = tile_m
    else:
        tile_m = 256
        M_p = _round_up(M, tile_m)
    grid_m = M_p // tile_m
    if M_p != M:
        ids_flat = jnp.pad(ids_flat, (0, M_p - M))   # pad ids -> row 0, sliced off

    # Generation-aware VMEM budget (≈54 MiB on v7x, ≈109 MiB on v5e/v6e).
    try:
        vmem_cap = int(pltpu.get_tpu_info().vmem_capacity_bytes)
    except Exception:
        vmem_cap = 64 * 1024 * 1024
    vmem_budget = max(min(int(vmem_cap * 0.85), vmem_cap - (8 << 20)),
                      32 * 1024 * 1024)

    table_bytes = ntoken * ninp * itemsize
    onehot_need = (table_bytes                      # table, single buffer
                   + tile_m * ntoken * 4            # materialized one-hot
                   + 2 * tile_m * ninp * itemsize   # double-buffered out tiles
                   + (4 << 20))                     # slack for internal scratch

    use_onehot = (ntoken <= _ONEHOT_MAX_NTOKEN) and (onehot_need <= vmem_budget)
    if force_path is not None:
        use_onehot = (force_path == "onehot")

    if use_onehot:
        ids_2d = ids_flat.reshape(M_p, 1)
        cost = pl.CostEstimate(
            flops=int(2 * M_p * ntoken * ninp),
            transcendentals=0,
            bytes_accessed=int(table_bytes + M_p * 4 + M_p * ninp * itemsize))
        out_flat = pl.pallas_call(
            _embed_onehot_kernel,
            out_shape=jax.ShapeDtypeStruct((M_p, ninp), dtype),
            grid_spec=pltpu.PrefetchScalarGridSpec(
                num_scalar_prefetch=0,
                grid=(grid_m,),
                in_specs=[
                    # ids tile for this M block
                    pl.BlockSpec((tile_m, 1), lambda i: (i, 0)),
                    # whole (unpadded!) table VMEM-resident, single buffer
                    pl.BlockSpec((ntoken, ninp), lambda i: (0, 0),
                                 pipeline_mode=pl.Buffered(1)),
                ],
                out_specs=pl.BlockSpec((tile_m, ninp), lambda i: (i, 0)),
            ),
            compiler_params=pltpu.CompilerParams(
                dimension_semantics=("parallel",),
                vmem_limit_bytes=int(min(max(onehot_need, 32 * 1024 * 1024),
                                         vmem_budget)),
            ),
            cost_estimate=cost,
        )(ids_2d, emb_table)
    else:
        dma_need = 2 * tile_m * ninp * itemsize + (4 << 20)
        cost = pl.CostEstimate(
            flops=0,
            transcendentals=0,
            bytes_accessed=int(2 * M_p * ninp * itemsize + M_p * 4))
        out_flat = pl.pallas_call(
            _embed_dma_kernel,
            out_shape=jax.ShapeDtypeStruct((M_p, ninp), dtype),
            grid_spec=pltpu.PrefetchScalarGridSpec(
                num_scalar_prefetch=1,                  # ids -> SMEM
                grid=(grid_m,),
                in_specs=[pl.BlockSpec(memory_space=pl.ANY)],   # table stays in HBM
                out_specs=pl.BlockSpec((tile_m, ninp), lambda i, ids: (i, 0)),
                scratch_shapes=[pltpu.SemaphoreType.DMA(())],
            ),
            compiler_params=pltpu.CompilerParams(
                dimension_semantics=("arbitrary",),
                vmem_limit_bytes=int(min(max(dma_need, 32 * 1024 * 1024),
                                         vmem_budget)),
            ),
            cost_estimate=cost,
        )(ids_flat, emb_table)

    outp = out_flat[:M].reshape(B, S * ninp)
    return outp, None


def _reference(inp, emb_table):
    """Pure-JAX reference of the PyTorch forward."""
    emb = emb_table[inp]                               # (S, B, ninp)
    return jnp.transpose(emb, (1, 0, 2)).reshape(inp.shape[1], -1)


if __name__ == "__main__":
    key = jax.random.PRNGKey(0)

    def check(name, ids, table, force_path=None):
        outp, hidden = mlp_forward(ids, table, force_path=force_path)
        outp = jax.block_until_ready(outp)
        assert hidden is None, name
        ref = _reference(ids, table)
        assert outp.shape == ref.shape, name
        assert jnp.allclose(outp, ref, atol=1e-5, rtol=1e-5), \
            f"mismatch vs reference: {name}"

    # 1) TPU-aligned toy config (one-hot / VMEM-resident path).
    k1, k2, key = jax.random.split(key, 3)
    t1 = jax.random.normal(k1, (32, 128), dtype=jnp.float32).at[0].set(0.0)
    i1 = jax.random.randint(k2, (8, 2), 0, 32, dtype=jnp.int32)       # (S, B)
    check("aligned-onehot", i1, t1)

    # 2) Unaligned shapes exercise the M-pad / slicing path (still one-hot,
    #    no table padding anywhere).
    k1, k2, key = jax.random.split(key, 3)
    t2 = jax.random.normal(k1, (19, 64), dtype=jnp.float32).at[0].set(0.0)
    i2 = jax.random.randint(k2, (5, 3), 0, 19, dtype=jnp.int32)
    check("unaligned-onehot", i2, t2)

    # 3) Same unaligned config forced through the HBM DMA-gather path.
    check("unaligned-dma", i2, t2, force_path="dma")

    # 4) Larger vocabulary naturally selects the HBM DMA-gather path.
    k1, k2, key = jax.random.split(key, 3)
    t3 = jax.random.normal(k1, (5000, 128), dtype=jnp.float32).at[0].set(0.0)
    i3 = jax.random.randint(k2, (8, 4), 0, 5000, dtype=jnp.int32)
    check("large-vocab-dma", i3, t3)

    print("KERNEL_OK")
</pallas_src>

<mosaic_0001>
module attributes {stable_mosaic.version = 11 : i64} {
  func.func @_embed_onehot_kernel(%arg0: i32, %arg1: memref<16x1xi32, #tpu.memory_space<vmem>>, %arg2: memref<32x128xf32, #tpu.memory_space<vmem>>, %arg3: memref<16x128xf32, #tpu.memory_space<vmem>>) attributes {dimension_semantics = [#tpu.dimension_semantics<parallel>], iteration_bounds = array<i64: 1>, scalar_prefetch = 0 : i64, scratch_operands = 0 : i64, tpu.core_type = #tpu.core_type<tc>, window_params = [{transform_indices = @transform_0, window_bounds = array<i64: 16, 1>}, {pipeline_mode = #tpu.pipeline_mode<synchronous>, transform_indices = @transform_1, window_bounds = array<i64: 32, 128>}, {transform_indices = @transform_2, window_bounds = array<i64: 16, 128>}]} {
    %c0 = arith.constant 0 : index
    %c0_0 = arith.constant 0 : index
    %0 = vector.load %arg1[%c0, %c0_0] : memref<16x1xi32, #tpu.memory_space<vmem>>, vector<16x1xi32>
    %1 = tpu.iota {dimensions = array<i32: 1>} : vector<16x32xi32>
    %2 = vector.broadcast %0 : vector<16x1xi32> to vector<16x32xi32>
    %3 = arith.cmpi eq, %1, %2 : vector<16x32xi32>
    %4 = arith.extui %3 : vector<16x32xi1> to vector<16x32xi32>
    %5 = arith.sitofp %4 : vector<16x32xi32> to vector<16x32xf32>
    %c0_1 = arith.constant 0 : index
    %c0_2 = arith.constant 0 : index
    %6 = vector.load %arg2[%c0_1, %c0_2] : memref<32x128xf32, #tpu.memory_space<vmem>>, vector<32x128xf32>
    %cst = arith.constant dense<0.000000e+00> : vector<16x128xf32>
    %7 = tpu.matmul %5, %6, %cst {dimension_numbers = #tpu.dot_dimension_numbers<[1], [0], [0], [1], [0, 0, 1, 1], [], []>} : vector<16x32xf32>, vector<32x128xf32>, vector<16x128xf32> -> vector<16x128xf32>
    %c0_3 = arith.constant 0 : index
    %c0_4 = arith.constant 0 : index
    %8 = vector.load %arg3[%c0_3, %c0_4] : memref<16x128xf32, #tpu.memory_space<vmem>>, vector<16x128xf32>
    tpu.vector_store %arg3[%c0_3, %c0_4], %7 {strides = array<i32>} : memref<16x128xf32, #tpu.memory_space<vmem>>, vector<16x128xf32>,
    return
  }
  func.func @transform_0(%arg0: i32) -> (i32, i32) {
    %c0_i32 = arith.constant 0 : i32
    %c0_i32_0 = arith.constant 0 : i32
    return %arg0, %c0_i32 : i32, i32
  }
  func.func @transform_1(%arg0: i32) -> (i32, i32) {
    %c0_i32 = arith.constant 0 : i32
    %c0_i32_0 = arith.constant 0 : i32
    %c0_i32_1 = arith.constant 0 : i32
    return %c0_i32, %c0_i32_0 : i32, i32
  }
  func.func @transform_2(%arg0: i32) -> (i32, i32) {
    %c0_i32 = arith.constant 0 : i32
    %c0_i32_0 = arith.constant 0 : i32
    return %arg0, %c0_i32 : i32, i32
  }
}

</mosaic_0001>

<llo_original>
// kernel: tpu_custom_call.1
$region0: #{tpu_custom_call.1}
  #allocation0 [shape = 'u32[]', space=smem, size = 0x4, offset = 0x4, fixed_abs, tag = 'smem constant byte address 0x4 - core index']
  #allocation1 [shape = 'u32[144,128]{1,0:T(1,128)}', space=vmem, size = 0x12000, scoped, tag = 'internal scratch']
  %s0 = inlined_call_operand.vmem [shape: s32[16,1], index: 0, kind: input, shape index: {}]
  %s1 = inlined_call_operand.hbm [shape: f32[32,128], index: 1, kind: input, shape index: {}]
  %s2 = inlined_call_operand.hbm [shape: f32[16,128], index: 2, kind: output, shape index: {}]
  %s3 = sld [smem:[#allocation0]]
  $region22: #{tpu_custom_call.1} parent=0
    _
  %s5 = ssub.s32 1, %s3
  %s6 = scalar_select 0, %s5, %s3
  $region1: #{tpu_custom_call.1} parent=0
    #allocation2 [shape = 'u8[16384]{0}', space=vmem, size = 0x4000, scoped, tag = 'input window, operand 1, single buffered']
    #allocation3 [shape = 's32[1]{0}', space=sflag, size = 0x4, scoped, tag = 'scoped memory for tpu_custom_call.1']
    #allocation4 [shape = 's32[1]{0}', space=sflag, size = 0x4, scoped, tag = 'scoped memory for tpu_custom_call.1']
    #allocation5 [shape = 'u8[8192]{0}', space=vmem, size = 0x2000, scoped, tag = 'output window, operand 0, single buffered']
    %7 = vsyncpa [#allocation3], 0
    %8 = vsyncpa [#allocation4], 0
    // Predicated region
    $region2: #{tpu_custom_call.1} parent=1 // pred_check
      _
    $region3: #{tpu_custom_call.1} parent=1 // pred_check_branch
      %10 = sbr.rel (0) target = $region5
    $region4: #{tpu_custom_call.1} parent=1 // pred_region
      _
    $region5: #{tpu_custom_call.1} parent=1 // pred_fallthru
      _
    // Predicated region
    $region6: #{tpu_custom_call.1} parent=1 // pred_check
      _
    $region7: #{tpu_custom_call.1} parent=1 // pred_check_branch
      %12 = sbr.rel (0) target = $region9
    $region8: #{tpu_custom_call.1} parent=1 // pred_region
      %s14 = ssub.s32 512, 512
      %15 = vsyncadd [#allocation3], %s14
      %s16 = sshll.u32 [#allocation2], 4
      %s17 = int_to_ptr.vmem [resolvable:$true] %s16
      %22 = dma.hbm_to_vmem [thread:$0]  %s1, 512, %s17, [#allocation3], 128, 128, 8
    $region9: #{tpu_custom_call.1} parent=1 // pred_fallthru
      _
    // Predicated region
    $region10: #{tpu_custom_call.1} parent=1 // pred_check
      _
    $region11: #{tpu_custom_call.1} parent=1 // pred_check_branch
      %24 = sbr.rel (0) target = $region13
    $region12: #{tpu_custom_call.1} parent=1 // pred_region
      %25 = dma.done [#allocation3], 512
    $region13: #{tpu_custom_call.1} parent=1 // pred_fallthru
      _
    %v26 = vld [vmem:[%s0] sm:$0xff]
    %v27 = vld [vmem:[%s0 + $0x8] sm:$0xff]
    %v28 = vlaneseq
    %v29 = vand.u32 %v28, 127
    %30 = vset.pattern.permute.xlu0 0
    %31 = vperm.xlu0 %30, %v26
    %v32 = vpop.permute.xlu0 %31
    %33 = vset.pattern.permute.xlu0 0
    %34 = vperm.xlu0 %33, %v27
    %v35 = vpop.permute.xlu0 %34
    %vm36 = vcmp.eq.s32.totalorder %v29, %v32
    %vm37 = vcmp.eq.s32.totalorder %v29, %v35
    %v38 = vsel %vm36, 1, 0
    %v39 = vsel %vm37, 1, 0
    %v40 = vcvt.s32.f32 %v38
    %v41 = vcvt.s32.f32 %v39
    %v42 = vld [vmem:[#allocation2] sm:$0xff]
    %v43 = vld [vmem:[#allocation2 + $0x8] sm:$0xff]
    %v44 = vld [vmem:[#allocation2 + $0x10] sm:$0xff]
    %v45 = vld [vmem:[#allocation2 + $0x18] sm:$0xff]
    %vm46 = vcmask 261120
    %v48 = vsel %vm46, %v40, 0
    %v51 = vsel %vm46, %v41, 0
    %53 = vmatprep.subr.mxu0 0.0
    %54 = vmatpush1.msra.mxu0 0.0
    %55 = vmatprep.subr.mxu0 0.0
    %56 = vmatpush1.msra.mxu0 0.0
    %57 = vmatprep.subr.mxu0 0.0
    %58 = vmatpush1.msra.mxu0 0.0
    %59 = vmatprep.subr.mxu0 0.0
    %60 = vmatpush1.msra.mxu0 0.0
    %61 = vmatprep.subr.mxu0 0.0
    %62 = vmatpush1.msra.mxu0 0.0
    %63 = vmatprep.subr.mxu0 0.0
    %64 = vmatpush1.msra.mxu0 0.0
    %65 = vmatprep.subr.mxu0 0.0
    %66 = vmatpush1.msra.mxu0 0.0
    %67 = vmatprep.subr.mxu0 0.0
    %68 = vmatpush1.msra.mxu0 0.0
    %69 = vmatprep.subr.mxu0 0.0
    %70 = vmatpush1.msra.mxu0 0.0
    %71 = vmatprep.subr.mxu0 0.0
    %72 = vmatpush1.msra.mxu0 0.0
    %73 = vmatprep.subr.mxu0 0.0
    %74 = vmatpush1.msra.mxu0 0.0
    %75 = vmatprep.subr.mxu0 0.0
    %76 = vmatpush1.msra.mxu0 0.0
    %77 = vmatprep.subr.mxu0 0.0
    %78 = vmatpush1.msra.mxu0 %v45
    %79 = vmatprep.subr.mxu0 0.0
    %80 = vmatpush1.msra.mxu0 %v44
    %81 = vmatprep.subr.mxu0 0.0
    %82 = vmatpush1.msra.mxu0 %v43
    %83 = vmatprep.subr.mxu0 0.0
    %84 = vmatpush1.msra.mxu0 %v42
    %85 = vmatprep.subr.mxu0 0.0
    %86 = vmatpush2.msra.mxu0 0.0
    %87 = vmatprep.subr.mxu0 0.0
    %88 = vmatpush2.msra.mxu0 0.0
    %89 = vmatprep.subr.mxu0 0.0
    %90 = vmatpush2.msra.mxu0 0.0
    %91 = vmatprep.subr.mxu0 0.0
    %92 = vmatpush2.msra.mxu0 0.0
    %93 = vmatprep.subr.mxu0 0.0
    %94 = vmatpush2.msra.mxu0 0.0
    %95 = vmatprep.subr.mxu0 0.0
    %96 = vmatpush2.msra.mxu0 0.0
    %97 = vmatprep.subr.mxu0 0.0
    %98 = vmatpush2.msra.mxu0 0.0
    %99 = vmatprep.subr.mxu0 0.0
    %100 = vmatpush2.msra.mxu0 0.0
    %101 = vmatprep.subr.mxu0 0.0
    %102 = vmatpush2.msra.mxu0 0.0
    %103 = vmatprep.subr.mxu0 0.0
    %104 = vmatpush2.msra.mxu0 0.0
    %105 = vmatprep.subr.mxu0 0.0
    %106 = vmatpush2.msra.mxu0 0.0
    %107 = vmatprep.subr.mxu0 0.0
    %108 = vmatpush2.msra.mxu0 0.0
    %109 = vmatprep.subr.mxu0 0.0
    %110 = vmatpush2.msra.mxu0 0.0
    %111 = vmatprep.subr.mxu0 0.0
    %112 = vmatpush2.msra.mxu0 0.0
    %113 = vmatprep.subr.mxu0 0.0
    %114 = vmatpush2.msra.mxu0 0.0
    %115 = vmatprep.subr.mxu0 0.0
    %116 = vmatpush2.msra.mxu0 0.0
    %117 = vmatprep.mubr.f32.mxu0 0.0
    %118 = vmatmul.mubr.f32.gmra.mxu0 %v48
    %v119 = vpop.f32.mrf.mxu0
    %v120 = vadd.f32 0.0, %v119
    %v121 = vpop.f32.mrf.mxu0
    %122 = vmatprep.mubr.f32.mxu0 0.0
    %123 = vmatmul.mubr.f32.gmra.mxu0 %v51
    %v124 = vpop.f32.mrf.mxu0
    %v125 = vadd.f32 0.0, %v124
    %v126 = vpop.f32.mrf.mxu0
    %127 = vdwg.mxu0
    %128 = vst [vmem:[#allocation5] sm:$0xff] %v120
    %129 = vst [vmem:[#allocation5 + $0x8] sm:$0xff] %v125
    // Predicated region
    $region14: #{tpu_custom_call.1} parent=1 // pred_check
      _
    $region15: #{tpu_custom_call.1} parent=1 // pred_check_branch
      %131 = sbr.rel (0) target = $region17
    $region16: #{tpu_custom_call.1} parent=1 // pred_region
      %s133 = ssub.s32 256, 256
      %134 = vsyncadd [#allocation4], %s133
      %s135 = sshll.u32 [#allocation5], 4
      %s136 = int_to_ptr.vmem [resolvable:$true] %s135
      %141 = dma.vmem_to_hbm [thread:$0]  %s136, 256, %s2, [#allocation4], 128, 128, 8
    $region17: #{tpu_custom_call.1} parent=1 // pred_fallthru
      _
    // Predicated region
    $region18: #{tpu_custom_call.1} parent=1 // pred_check
      _
    $region19: #{tpu_custom_call.1} parent=1 // pred_check_branch
      %143 = sbr.rel (0) target = $region21
    $region20: #{tpu_custom_call.1} parent=1 // pred_region
      %144 = dma.done [#allocation4], 256
    $region21: #{tpu_custom_call.1} parent=1 // pred_fallthru
      _
    %145 = vsyncpa [#allocation3], 1
    %146 = vsyncpa [#allocation4], 1

</llo_original>
